<compile_context>
chip_gen: v6e
topology: v6e:2x2x1
jax: 0.10.0
libtpu: 0.0.40
codegen_flags: <defaults>
</compile_context>

<pallas_src>
import functools

import jax
import jax.numpy as jnp
from jax import lax
from jax.experimental import pallas as pl
from jax.experimental.pallas import tpu as pltpu

BN_EPS = 1e-5


def _round_up(x, m):
    return (x + m - 1) // m * m


def _stats_kernel(p_ref, w_ref, sum_ref, sq_ref):
    # p_ref: [TM, K_pad] bf16, w_ref: [K_pad, C_pad] bf16 (resident across the grid)
    # sum_ref / sq_ref: [1, C_pad] f32 accumulators, grid-resident (constant block index).
    @pl.when(pl.program_id(0) == 0)
    def _():
        sum_ref[...] = jnp.zeros_like(sum_ref)
        sq_ref[...] = jnp.zeros_like(sq_ref)

    y = jnp.dot(p_ref[...], w_ref[...], preferred_element_type=jnp.float32)
    sum_ref[...] += jnp.sum(y, axis=0, keepdims=True)
    sq_ref[...] += jnp.sum(y * y, axis=0, keepdims=True)


def _norm_kernel(p_ref, w_ref, scale_ref, shift_ref, o_ref):
    # Recompute the conv tile and apply the folded BN affine: o = y * scale + shift.
    y = jnp.dot(p_ref[...], w_ref[...], preferred_element_type=jnp.float32)
    o_ref[...] = (y * scale_ref[...] + shift_ref[...]).astype(o_ref.dtype)


@functools.partial(
    jax.jit, static_argnames=("kSize", "stride", "padding", "dilation", "tile_m"))
def cb2d_forward(x, w, gamma, beta, *, kSize, stride, padding, dilation, tile_m=256):
    """x: [N, C_in, H, W] (NCHW, as in PyTorch). Returns [N, C_out, H_out, W_out] (f32)."""
    N, Cin, H, W = x.shape
    Cout = w.shape[0]
    kh = kw = kSize
    pad = dilation if dilation > 1 else padding  # CB2D.__init__ padding override

    H_out = (H + 2 * pad - dilation * (kh - 1) - 1) // stride + 1
    W_out = (W + 2 * pad - dilation * (kw - 1) - 1) // stride + 1

    M = N * H_out * W_out
    K = Cin * kh * kw
    K_pad = _round_up(K, 128)       # MXU / lane-aligned contraction dim
    C_pad = _round_up(Cout, 128)    # lane-dense output channels (unmasked vst)
    TM = tile_m                     # rows per grid step (keep <= ~2048 for v7x VMEM budget)
    M_pad = _round_up(M, TM)
    num_tiles = M_pad // TM

    # --- glue: im2col in plain JAX (bf16 to halve HBM traffic of the patch matrix) ---
    xb = x.astype(jnp.bfloat16)
    xp = jnp.pad(xb, ((0, 0), (0, 0), (pad, pad), (pad, pad)))
    cols = []
    for i in range(kh):
        for j in range(kw):
            hs, ws = i * dilation, j * dilation
            cols.append(xp[:, :, hs:hs + stride * H_out:stride, ws:ws + stride * W_out:stride])
    # [N, Cin, kh*kw, H_out, W_out] with taps ordered (i, j) -> matches OIHW weight flattening
    patches = jnp.stack(cols, axis=2)
    patches = patches.transpose(0, 3, 4, 1, 2).reshape(M, K)
    patches = jnp.pad(patches, ((0, M_pad - M), (0, K_pad - K)))          # bf16 [M_pad, K_pad]
    wmat = w.astype(jnp.bfloat16).reshape(Cout, K).T                      # [K, Cout]
    wmat = jnp.pad(wmat, ((0, K_pad - K), (0, C_pad - Cout)))             # bf16 [K_pad, C_pad]

    cparams_kwargs = dict(vmem_limit_bytes=32 * 1024 * 1024)  # raise if TM is increased

    # ---- pass 1: per-channel sum / sum-of-squares of y over all M rows ----
    # Zero-padded rows (and zero-padded channels) contribute 0 to both sums, so the
    # statistics stay exact when dividing by the true M below.
    sum_y, sum_yy = pl.pallas_call(
        _stats_kernel,
        out_shape=(jax.ShapeDtypeStruct((1, C_pad), jnp.float32),
                   jax.ShapeDtypeStruct((1, C_pad), jnp.float32)),
        grid_spec=pltpu.PrefetchScalarGridSpec(
            num_scalar_prefetch=0,
            grid=(num_tiles,),
            in_specs=[pl.BlockSpec((TM, K_pad), lambda i: (i, 0)),
                      pl.BlockSpec((K_pad, C_pad), lambda i: (0, 0))],
            out_specs=(pl.BlockSpec((1, C_pad), lambda i: (0, 0)),
                       pl.BlockSpec((1, C_pad), lambda i: (0, 0)))),
        compiler_params=pltpu.CompilerParams(
            dimension_semantics=("arbitrary",), **cparams_kwargs),
    )(patches, wmat)

    # Fold BN (training-mode, biased variance) into per-channel scale/shift.
    inv_m = 1.0 / float(M)
    mean = sum_y * inv_m
    var = jnp.maximum(sum_yy * inv_m - mean * mean, 0.0)
    g = jnp.pad(gamma.astype(jnp.float32), (0, C_pad - Cout)).reshape(1, C_pad)
    b = jnp.pad(beta.astype(jnp.float32), (0, C_pad - Cout)).reshape(1, C_pad)
    scale = g * lax.rsqrt(var + BN_EPS)
    shift = b - mean * scale

    # ---- pass 2: recompute y tile-by-tile and apply the folded affine ----
    out = pl.pallas_call(
        _norm_kernel,
        out_shape=jax.ShapeDtypeStruct((M_pad, C_pad), jnp.float32),
        grid_spec=pltpu.PrefetchScalarGridSpec(
            num_scalar_prefetch=0,
            grid=(num_tiles,),
            in_specs=[pl.BlockSpec((TM, K_pad), lambda i: (i, 0)),
                      pl.BlockSpec((K_pad, C_pad), lambda i: (0, 0)),
                      pl.BlockSpec((1, C_pad), lambda i: (0, 0)),
                      pl.BlockSpec((1, C_pad), lambda i: (0, 0))],
            out_specs=pl.BlockSpec((TM, C_pad), lambda i: (i, 0))),
        compiler_params=pltpu.CompilerParams(
            dimension_semantics=("parallel",), **cparams_kwargs),
    )(patches, wmat, scale, shift)

    # strip padding, back to NCHW
    out = out[:M, :Cout].reshape(N, H_out, W_out, Cout).transpose(0, 3, 1, 2)
    return out


def _reference(x, w, gamma, beta, *, stride, padding, dilation):
    # Reference uses the same bf16 conv inputs (f32 accumulation) as the kernel.
    pad = dilation if dilation > 1 else padding
    y = lax.conv_general_dilated(
        x.astype(jnp.bfloat16), w.astype(jnp.bfloat16),
        window_strides=(stride, stride),
        padding=((pad, pad), (pad, pad)),
        rhs_dilation=(dilation, dilation),
        dimension_numbers=("NCHW", "OIHW", "NCHW"),
        preferred_element_type=jnp.float32)
    mean = y.mean(axis=(0, 2, 3), keepdims=True)
    var = ((y - mean) ** 2).mean(axis=(0, 2, 3), keepdims=True)
    return (y - mean) * lax.rsqrt(var + BN_EPS) * gamma.reshape(1, -1, 1, 1) \
        + beta.reshape(1, -1, 1, 1)


if __name__ == "__main__":
    # CB2D(inChannels=4, outChannels=8, kSize=3, stride=1, padding=1, dilation=1)
    inC, outC, kSize, stride, padding, dilation = 4, 8, 3, 1, 1, 1
    N, H, W = 2, 16, 16

    key = jax.random.PRNGKey(0)
    kx, kw = jax.random.split(key)
    x = jax.random.normal(kx, (N, inC, H, W), dtype=jnp.float32)
    w = 0.1 * jax.random.normal(kw, (outC, inC, kSize, kSize), dtype=jnp.float32)
    # nn.BatchNorm2d default init: weight (gamma) = 1, bias (beta) = 0
    gamma = jnp.ones((outC,), dtype=jnp.float32)
    beta = jnp.zeros((outC,), dtype=jnp.float32)

    out = cb2d_forward(x, w, gamma, beta,
                       kSize=kSize, stride=stride, padding=padding, dilation=dilation)
    out = jax.block_until_ready(out)

    ref = _reference(x, w, gamma, beta, stride=stride, padding=padding, dilation=dilation)
    assert out.shape == ref.shape, (out.shape, ref.shape)
    assert jnp.allclose(out, ref, atol=2e-3, rtol=2e-3), float(jnp.max(jnp.abs(out - ref)))

    print("KERNEL_OK")
</pallas_src>

<mosaic_0001>
module attributes {stable_mosaic.version = 11 : i64} {
  func.func @_stats_kernel(%arg0: i32, %arg1: memref<256x128xbf16, #tpu.memory_space<vmem>>, %arg2: memref<128x128xbf16, #tpu.memory_space<vmem>>, %arg3: memref<1x128xf32, #tpu.memory_space<vmem>>, %arg4: memref<1x128xf32, #tpu.memory_space<vmem>>) attributes {dimension_semantics = [#tpu.dimension_semantics<arbitrary>], iteration_bounds = array<i64: 2>, scalar_prefetch = 0 : i64, scratch_operands = 0 : i64, tpu.core_type = #tpu.core_type<tc>, window_params = [{transform_indices = @transform_0, window_bounds = array<i64: 256, 128>}, {pipeline_mode = #tpu.pipeline_mode<synchronous>, transform_indices = @transform_1, window_bounds = array<i64: 128, 128>}, {pipeline_mode = #tpu.pipeline_mode<synchronous>, transform_indices = @transform_2, window_bounds = array<i64: 1, 128>}, {pipeline_mode = #tpu.pipeline_mode<synchronous>, transform_indices = @transform_3, window_bounds = array<i64: 1, 128>}]} {
    %c0_i32 = arith.constant 0 : i32
    %0 = arith.cmpi eq, %arg0, %c0_i32 : i32
    %1 = arith.extui %0 : i1 to i32
    %c0_i32_0 = arith.constant 0 : i32
    %2 = arith.cmpi ne, %1, %c0_i32_0 : i32
    scf.if %2 {
      %cst_14 = arith.constant 0.000000e+00 : f32
      %17 = vector.broadcast %cst_14 : f32 to vector<1x128xf32>
      %c0_15 = arith.constant 0 : index
      %c0_16 = arith.constant 0 : index
      %18 = vector.load %arg3[%c0_15, %c0_16] : memref<1x128xf32, #tpu.memory_space<vmem>>, vector<1x128xf32>
      tpu.vector_store %arg3[%c0_15, %c0_16], %17 {strides = array<i32>} : memref<1x128xf32, #tpu.memory_space<vmem>>, vector<1x128xf32>,
      %cst_17 = arith.constant 0.000000e+00 : f32
      %19 = vector.broadcast %cst_17 : f32 to vector<1x128xf32>
      %c0_18 = arith.constant 0 : index
      %c0_19 = arith.constant 0 : index
      %20 = vector.load %arg4[%c0_18, %c0_19] : memref<1x128xf32, #tpu.memory_space<vmem>>, vector<1x128xf32>
      tpu.vector_store %arg4[%c0_18, %c0_19], %19 {strides = array<i32>} : memref<1x128xf32, #tpu.memory_space<vmem>>, vector<1x128xf32>,
    } else {
    }
    %c0 = arith.constant 0 : index
    %c0_1 = arith.constant 0 : index
    %3 = vector.load %arg1[%c0, %c0_1] : memref<256x128xbf16, #tpu.memory_space<vmem>>, vector<256x128xbf16>
    %c0_2 = arith.constant 0 : index
    %c0_3 = arith.constant 0 : index
    %4 = vector.load %arg2[%c0_2, %c0_3] : memref<128x128xbf16, #tpu.memory_space<vmem>>, vector<128x128xbf16>
    %cst = arith.constant dense<0.000000e+00> : vector<256x128xf32>
    %5 = tpu.matmul %3, %4, %cst {dimension_numbers = #tpu.dot_dimension_numbers<[1], [0], [0], [1], [0, 0, 1, 1], [], []>} : vector<256x128xbf16>, vector<128x128xbf16>, vector<256x128xf32> -> vector<256x128xf32>
    %c0_4 = arith.constant 0 : index
    %c0_5 = arith.constant 0 : index
    %6 = vector.load %arg3[%c0_4, %c0_5] : memref<1x128xf32, #tpu.memory_space<vmem>>, vector<1x128xf32>
    %cst_6 = arith.constant dense<0.000000e+00> : vector<128xf32>
    %7 = vector.multi_reduction <add>, %5, %cst_6 [0] : vector<256x128xf32> to vector<128xf32>
    %8 = vector.shape_cast %7 : vector<128xf32> to vector<1x128xf32>
    %9 = arith.addf %6, %8 : vector<1x128xf32>
    %c0_7 = arith.constant 0 : index
    %c0_8 = arith.constant 0 : index
    %10 = vector.load %arg3[%c0_7, %c0_8] : memref<1x128xf32, #tpu.memory_space<vmem>>, vector<1x128xf32>
    tpu.vector_store %arg3[%c0_7, %c0_8], %9 {strides = array<i32>} : memref<1x128xf32, #tpu.memory_space<vmem>>, vector<1x128xf32>,
    %c0_9 = arith.constant 0 : index
    %c0_10 = arith.constant 0 : index
    %11 = vector.load %arg4[%c0_9, %c0_10] : memref<1x128xf32, #tpu.memory_space<vmem>>, vector<1x128xf32>
    %12 = arith.mulf %5, %5 : vector<256x128xf32>
    %cst_11 = arith.constant dense<0.000000e+00> : vector<128xf32>
    %13 = vector.multi_reduction <add>, %12, %cst_11 [0] : vector<256x128xf32> to vector<128xf32>
    %14 = vector.shape_cast %13 : vector<128xf32> to vector<1x128xf32>
    %15 = arith.addf %11, %14 : vector<1x128xf32>
    %c0_12 = arith.constant 0 : index
    %c0_13 = arith.constant 0 : index
    %16 = vector.load %arg4[%c0_12, %c0_13] : memref<1x128xf32, #tpu.memory_space<vmem>>, vector<1x128xf32>
    tpu.vector_store %arg4[%c0_12, %c0_13], %15 {strides = array<i32>} : memref<1x128xf32, #tpu.memory_space<vmem>>, vector<1x128xf32>,
    return
  }
  func.func @transform_0(%arg0: i32) -> (i32, i32) {
    %c0_i32 = arith.constant 0 : i32
    %c0_i32_0 = arith.constant 0 : i32
    return %arg0, %c0_i32 : i32, i32
  }
  func.func @transform_1(%arg0: i32) -> (i32, i32) {
    %c0_i32 = arith.constant 0 : i32
    %c0_i32_0 = arith.constant 0 : i32
    %c0_i32_1 = arith.constant 0 : i32
    return %c0_i32, %c0_i32_0 : i32, i32
  }
  func.func @transform_2(%arg0: i32) -> (i32, i32) {
    %c0_i32 = arith.constant 0 : i32
    %c0_i32_0 = arith.constant 0 : i32
    %c0_i32_1 = arith.constant 0 : i32
    return %c0_i32, %c0_i32_0 : i32, i32
  }
  func.func @transform_3(%arg0: i32) -> (i32, i32) {
    %c0_i32 = arith.constant 0 : i32
    %c0_i32_0 = arith.constant 0 : i32
    %c0_i32_1 = arith.constant 0 : i32
    return %c0_i32, %c0_i32_0 : i32, i32
  }
}

module attributes {stable_mosaic.version = 11 : i64} {
  func.func @_norm_kernel(%arg0: i32, %arg1: memref<256x128xbf16, #tpu.memory_space<vmem>>, %arg2: memref<128x128xbf16, #tpu.memory_space<vmem>>, %arg3: memref<1x128xf32, #tpu.memory_space<vmem>>, %arg4: memref<1x128xf32, #tpu.memory_space<vmem>>, %arg5: memref<256x128xf32, #tpu.memory_space<vmem>>) attributes {dimension_semantics = [#tpu.dimension_semantics<parallel>], iteration_bounds = array<i64: 2>, scalar_prefetch = 0 : i64, scratch_operands = 0 : i64, tpu.core_type = #tpu.core_type<tc>, window_params = [{transform_indices = @transform_0, window_bounds = array<i64: 256, 128>}, {pipeline_mode = #tpu.pipeline_mode<synchronous>, transform_indices = @transform_1, window_bounds = array<i64: 128, 128>}, {pipeline_mode = #tpu.pipeline_mode<synchronous>, transform_indices = @transform_2, window_bounds = array<i64: 1, 128>}, {pipeline_mode = #tpu.pipeline_mode<synchronous>, transform_indices = @transform_3, window_bounds = array<i64: 1, 128>}, {transform_indices = @transform_4, window_bounds = array<i64: 256, 128>}]} {
    %c0 = arith.constant 0 : index
    %c0_0 = arith.constant 0 : index
    %0 = vector.load %arg1[%c0, %c0_0] : memref<256x128xbf16, #tpu.memory_space<vmem>>, vector<256x128xbf16>
    %c0_1 = arith.constant 0 : index
    %c0_2 = arith.constant 0 : index
    %1 = vector.load %arg2[%c0_1, %c0_2] : memref<128x128xbf16, #tpu.memory_space<vmem>>, vector<128x128xbf16>
    %cst = arith.constant dense<0.000000e+00> : vector<256x128xf32>
    %2 = tpu.matmul %0, %1, %cst {dimension_numbers = #tpu.dot_dimension_numbers<[1], [0], [0], [1], [0, 0, 1, 1], [], []>} : vector<256x128xbf16>, vector<128x128xbf16>, vector<256x128xf32> -> vector<256x128xf32>
    %c0_3 = arith.constant 0 : index
    %c0_4 = arith.constant 0 : index
    %3 = vector.load %arg3[%c0_3, %c0_4] : memref<1x128xf32, #tpu.memory_space<vmem>>, vector<1x128xf32>
    %4 = vector.broadcast %3 : vector<1x128xf32> to vector<256x128xf32>
    %5 = arith.mulf %2, %4 : vector<256x128xf32>
    %c0_5 = arith.constant 0 : index
    %c0_6 = arith.constant 0 : index
    %6 = vector.load %arg4[%c0_5, %c0_6] : memref<1x128xf32, #tpu.memory_space<vmem>>, vector<1x128xf32>
    %7 = vector.broadcast %6 : vector<1x128xf32> to vector<256x128xf32>
    %8 = arith.addf %5, %7 : vector<256x128xf32>
    %c0_7 = arith.constant 0 : index
    %c0_8 = arith.constant 0 : index
    %9 = vector.load %arg5[%c0_7, %c0_8] : memref<256x128xf32, #tpu.memory_space<vmem>>, vector<256x128xf32>
    tpu.vector_store %arg5[%c0_7, %c0_8], %8 {strides = array<i32>} : memref<256x128xf32, #tpu.memory_space<vmem>>, vector<256x128xf32>,
    return
  }
  func.func @transform_0(%arg0: i32) -> (i32, i32) {
    %c0_i32 = arith.constant 0 : i32
    %c0_i32_0 = arith.constant 0 : i32
    return %arg0, %c0_i32 : i32, i32
  }
  func.func @transform_1(%arg0: i32) -> (i32, i32) {
    %c0_i32 = arith.constant 0 : i32
    %c0_i32_0 = arith.constant 0 : i32
    %c0_i32_1 = arith.constant 0 : i32
    return %c0_i32, %c0_i32_0 : i32, i32
  }
  func.func @transform_2(%arg0: i32) -> (i32, i32) {
    %c0_i32 = arith.constant 0 : i32
    %c0_i32_0 = arith.constant 0 : i32
    %c0_i32_1 = arith.constant 0 : i32
    return %c0_i32, %c0_i32_0 : i32, i32
  }
  func.func @transform_3(%arg0: i32) -> (i32, i32) {
    %c0_i32 = arith.constant 0 : i32
    %c0_i32_0 = arith.constant 0 : i32
    %c0_i32_1 = arith.constant 0 : i32
    return %c0_i32, %c0_i32_0 : i32, i32
  }
  func.func @transform_4(%arg0: i32) -> (i32, i32) {
    %c0_i32 = arith.constant 0 : i32
    %c0_i32_0 = arith.constant 0 : i32
    return %arg0, %c0_i32 : i32, i32
  }
}

</mosaic_0001>

<llo_original>
// kernel: cb2d_forward.2
$region0: #{cb2d_forward.2}
  #allocation0 [shape = 'u32[]', space=smem, size = 0x4, offset = 0x4, fixed_abs, tag = 'smem constant byte address 0x4 - core index']
  #allocation1 [shape = 'u32[144,128]{1,0:T(1,128)}', space=vmem, size = 0x12000, scoped, tag = 'internal scratch']
  %s0 = inlined_call_operand.vmem [shape: bf16[512,128], index: 0, kind: input, shape index: {}]
  %s1 = inlined_call_operand.vmem [shape: bf16[128,128], index: 1, kind: input, shape index: {}]
  %s2 = inlined_call_operand.vmem [shape: f32[1,128], index: 2, kind: output, shape index: {0}]
  %s3 = inlined_call_operand.vmem [shape: f32[1,128], index: 3, kind: output, shape index: {1}]
  %4 = xla_tuple %s2, %s3
  %s5 = sld [smem:[#allocation0]]
  $region53: #{cb2d_forward.2} parent=0
    _
  %s7 = ssub.s32 1, %s5
  %s8 = scalar_select 0, %s7, %s5
  loop: start=0, step=1, limit=4
  $region2: #{cb2d_forward.2} parent=0 // loop_pre_header
    _
  $region3: #{cb2d_forward.2} parent=0 // loop_header
    %s10 = sphi 0, %s14
    %p11 = scmp.ge.s32.totalorder %s10, 4
    %s20 = sphi 0, %s22
    %s23 = sphi 0, %s20
    %s24 = sphi 0, %s23
    %s40 = sphi 0, %s24
    %s44 = sphi 0, %s44
    %s46 = sphi 0, %s44
    %s47 = sphi 0, %s46
    %s61 = sphi 0, %s47
    %s65 = sphi 0, %s65
    %s67 = sphi 0, %s65
    %s68 = sphi 0, %s67
    %s82 = sphi 0, %s68
    %s86 = sphi 0, %s86
    %s88 = sphi 0, %s86
    %s89 = sphi 0, %s88
    %s103 = sphi 0, %s89
  $region4: #{cb2d_forward.2} parent=0 // loop_header_branch
    %13 = sbr.rel (%p11) target = $region8
  $region5: #{cb2d_forward.2} parent=0 // loop_body
    %s15 = ssub.s32 %s10, 1
    %s16 = ssub.s32 %s10, 2
    %s17 = sadd.s32 %s10, 1
    %s18 = ssub.s32 %s10, %s17
    %p19 = scmp.eq.s32.totalorder %s18, 0
    %s21 = sadd.s32 %s20, 1
    %s22 = scalar_select %p19, %s20, %s21
    %p25 = pneg %p19
    %p26 = scmp.eq.s32.totalorder %s10, 1
    %p27 = por %p25, %p26
    %p28 = scmp.ne.s32.totalorder %s20, %s23
    %p29 = scmp.eq.s32.totalorder %s10, 0
    %p30 = por %p28, %p29
    %p31 = scmp.ne.s32.totalorder %s20, %s23
    %p32 = scmp.eq.s32.totalorder %s15, 1
    %p33 = por %p31, %p32
    %p34 = scmp.ne.s32.totalorder %s23, %s24
    %p35 = scmp.eq.s32.totalorder %s15, 0
    %p36 = por %p34, %p35
    %p37 = scmp.ne.s32.totalorder %s23, %s24
    %p38 = scmp.eq.s32.totalorder %s16, 1
    %p39 = por %p37, %p38
    %p41 = scmp.ne.s32.totalorder %s24, %s40
    %p42 = scmp.eq.s32.totalorder %s16, 0
    %p43 = por %p41, %p42
    %s45 = sadd.s32 %s44, 1
    %p48 = scmp.eq.s32.totalorder %s10, 1
    %p49 = scmp.ne.s32.totalorder %s44, %s46
    %p50 = scmp.eq.s32.totalorder %s10, 0
    %p51 = por %p49, %p50
    %p52 = scmp.ne.s32.totalorder %s44, %s46
    %p53 = scmp.eq.s32.totalorder %s15, 1
    %p54 = por %p52, %p53
    %p55 = scmp.ne.s32.totalorder %s46, %s47
    %p56 = scmp.eq.s32.totalorder %s15, 0
    %p57 = por %p55, %p56
    %p58 = scmp.ne.s32.totalorder %s46, %s47
    %p59 = scmp.eq.s32.totalorder %s16, 1
    %p60 = por %p58, %p59
    %p62 = scmp.ne.s32.totalorder %s47, %s61
    %p63 = scmp.eq.s32.totalorder %s16, 0
    %p64 = por %p62, %p63
    %s66 = sadd.s32 %s65, 1
    %p69 = scmp.eq.s32.totalorder %s10, 1
    %p70 = scmp.ne.s32.totalorder %s65, %s67
    %p71 = scmp.eq.s32.totalorder %s10, 0
    %p72 = por %p70, %p71
    %p73 = scmp.ne.s32.totalorder %s65, %s67
    %p74 = scmp.eq.s32.totalorder %s15, 1
    %p75 = por %p73, %p74
    %p76 = scmp.ne.s32.totalorder %s67, %s68
    %p77 = scmp.eq.s32.totalorder %s15, 0
    %p78 = por %p76, %p77
    %p79 = scmp.ne.s32.totalorder %s67, %s68
    %p80 = scmp.eq.s32.totalorder %s16, 1
    %p81 = por %p79, %p80
    %p83 = scmp.ne.s32.totalorder %s68, %s82
    %p84 = scmp.eq.s32.totalorder %s16, 0
    %p85 = por %p83, %p84
    %s87 = sadd.s32 %s86, 1
    %p90 = scmp.eq.s32.totalorder %s10, 1
    %p91 = scmp.ne.s32.totalorder %s86, %s88
    %p92 = scmp.eq.s32.totalorder %s10, 0
    %p93 = por %p91, %p92
    %p94 = scmp.ne.s32.totalorder %s86, %s88
    %p95 = scmp.eq.s32.totalorder %s15, 1
    %p96 = por %p94, %p95
    %p97 = scmp.ne.s32.totalorder %s88, %s89
    %p98 = scmp.eq.s32.totalorder %s15, 0
    %p99 = por %p97, %p98
    %p100 = scmp.ne.s32.totalorder %s88, %s89
    %p101 = scmp.eq.s32.totalorder %s16, 1
    %p102 = por %p100, %p101
    %p104 = scmp.ne.s32.totalorder %s89, %s103
    %p105 = scmp.eq.s32.totalorder %s16, 0
    %p106 = por %p104, %p105
    %p107 = scmp.le.s32.totalorder 1, %s10
    %p108 = scmp.lt.s32.totalorder %s10, 3
    %p109 = pnand %p107, %p108
    %p110 = pneg %p109
    // Predicated region
    $region9: #{cb2d_forward.2} parent=5 // pred_check
      _
    $region10: #{cb2d_forward.2} parent=5 // pred_check_branch
      %112 = sbr.rel (%p109) target = $region12
    $region11: #{cb2d_forward.2} parent=5 // pred_region
      %s113 = ssub.s32 %s10, 1
      // Predicated region
      $region13: #{cb2d_forward.2} parent=11 // pred_check
        %p114 = pneg %p57
      $region14: #{cb2d_forward.2} parent=11 // pred_check_branch
        %116 = sbr.rel (%p114) target = $region16
      $region15: #{cb2d_forward.2} parent=11 // pred_region
        _
      $region16: #{cb2d_forward.2} parent=11 // pred_fallthru
        _
    $region12: #{cb2d_forward.2} parent=5 // pred_fallthru
      _
    %p117 = scmp.lt.s32.totalorder %s10, 2
    // Predicated region
    $region17: #{cb2d_forward.2} parent=5 // pred_check
      %p118 = pneg %p117
    $region18: #{cb2d_forward.2} parent=5 // pred_check_branch
      %120 = sbr.rel (%p118) target = $region20
    $region19: #{cb2d_forward.2} parent=5 // pred_region
      // Predicated region
      $region21: #{cb2d_forward.2} parent=19 // pred_check
        %p121 = pneg %p30
      $region22: #{cb2d_forward.2} parent=19 // pred_check_branch
        %123 = sbr.rel (%p121) target = $region24
      $region23: #{cb2d_forward.2} parent=19 // pred_region
        %s124 = smul.u32 32, %s10
        %p125 = scmp.lt.s32.totalorder %s124, 63
        %s126 = scalar_select %p125, %s124, 63
        %s127 = smul.addr %s126, 4
        %s128 = scalar_lea.vmem %s0, %s127
        %s129 = smul.u32 32, %s10
      $region24: #{cb2d_forward.2} parent=19 // pred_fallthru
        _
    $region20: #{cb2d_forward.2} parent=5 // pred_fallthru
      _
    %p130 = scmp.le.s32.totalorder 1, %s10
    %p131 = scmp.lt.s32.totalorder %s10, 3
    %p132 = pnand %p130, %p131
    %p133 = pneg %p132
    // Predicated region
    $region25: #{cb2d_forward.2} parent=5 // pred_check
      _
    $region26: #{cb2d_forward.2} parent=5 // pred_check_branch
      %135 = sbr.rel (%p132) target = $region28
    $region27: #{cb2d_forward.2} parent=5 // pred_region
      %s136 = ssub.s32 %s10, 1
      %s137 = smul.u32 32, %s15
      %p138 = scmp.lt.s32.totalorder %s137, 63
      %s139 = scalar_select %p138, %s137, 63
      %s140 = smul.addr %s139, 4
      %s141 = scalar_lea.vmem %s0, %s140
      %p142 = pneg %p36
      %p143 = pneg %p33
      %p144 = pneg %p57
      %p145 = pneg %p54
      %p146 = pneg %p78
      %p147 = pneg %p75
      %p148 = pneg %p99
      %p149 = pneg %p96
      %s150 = smul.u32 32, %s15
      %p151 = scmp.lt.s32.totalorder %s150, 63
      %s152 = scalar_select %p151, %s150, 63
      %s153 = smul.addr %s152, 4
      %s154 = scalar_lea.vmem %s0, %s153
      %s155 = smul.u32 32, %s15
      %p157 = scmp.eq.s32.totalorder %s15, 0
      // Predicated region
      $region29: #{cb2d_forward.2} parent=27 // pred_check
        %p158 = pneg %p157
      $region30: #{cb2d_forward.2} parent=27 // pred_check_branch
        %160 = sbr.rel (%p158) target = $region32
      $region31: #{cb2d_forward.2} parent=27 // pred_region
        %161 = vst [vmem:[%s2] sm:$0x1] 0.0
        %162 = vst [vmem:[%s3] sm:$0x1] 0.0
      $region32: #{cb2d_forward.2} parent=27 // pred_fallthru
        _
      %v163 = vld [vmem:[%s154] sm:$0xf]
      %v164 = vld [vmem:[%s154 + $0x4] sm:$0xf]
      %v165 = vld [vmem:[%s154 + $0x8] sm:$0xf]
      %v166 = vld [vmem:[%s154 + $0xc] sm:$0xf]
      %v167 = vld [vmem:[%s154 + $0x10] sm:$0xf]
      %v168 = vld [vmem:[%s154 + $0x14] sm:$0xf]
      %v169 = vld [vmem:[%s154 + $0x18] sm:$0xf]
      %v170 = vld [vmem:[%s154 + $0x1c] sm:$0xf]
      %v171 = vld [vmem:[%s154 + $0x20] sm:$0xf]
      %v172 = vld [vmem:[%s154 + $0x24] sm:$0xf]
      %v173 = vld [vmem:[%s154 + $0x28] sm:$0xf]
      %v174 = vld [vmem:[%s154 + $0x2c] sm:$0xf]
      %v175 = vld [vmem:[%s154 + $0x30] sm:$0xf]
      %v176 = vld [vmem:[%s154 + $0x34] sm:$0xf]
      %v177 = vld [vmem:[%s154 + $0x38] sm:$0xf]
      %v178 = vld [vmem:[%s154 + $0x3c] sm:$0xf]
      %v179 = vld [vmem:[%s154 + $0x40] sm:$0xf]
      %v180 = vld [vmem:[%s154 + $0x44] sm:$0xf]
      %v181 = vld [vmem:[%s154 + $0x48] sm:$0xf]
      %v182 = vld [vmem:[%s154 + $0x4c] sm:$0xf]
      %v183 = vld [vmem:[%s154 + $0x50] sm:$0xf]
      %v184 = vld [vmem:[%s154 + $0x54] sm:$0xf]
      %v185 = vld [vmem:[%s154 + $0x58] sm:$0xf]
      %v186 = vld [vmem:[%s154 + $0x5c] sm:$0xf]
      %v187 = vld [vmem:[%s154 + $0x60] sm:$0xf]
      %v188 = vld [vmem:[%s154 + $0x64] sm:$0xf]
      %v189 = vld [vmem:[%s154 + $0x68] sm:$0xf]
      %v190 = vld [vmem:[%s154 + $0x6c] sm:$0xf]
      %v191 = vld [vmem:[%s154 + $0x70] sm:$0xf]
      %v192 = vld [vmem:[%s154 + $0x74] sm:$0xf]
      %v193 = vld [vmem:[%s154 + $0x78] sm:$0xf]
      %v194 = vld [vmem:[%s154 + $0x7c] sm:$0xf]
      %v195 = vld [vmem:[%s1] sm:$0xf]
      %v196 = vld [vmem:[%s1 + $0x4] sm:$0xf]
      %v197 = vld [vmem:[%s1 + $0x8] sm:$0xf]
      %v198 = vld [vmem:[%s1 + $0xc] sm:$0xf]
      %v199 = vld [vmem:[%s1 + $0x10] sm:$0xf]
      %v200 = vld [vmem:[%s1 + $0x14] sm:$0xf]
      %v201 = vld [vmem:[%s1 + $0x18] sm:$0xf]
      %v202 = vld [vmem:[%s1 + $0x1c] sm:$0xf]
      %v203 = vld [vmem:[%s1 + $0x20] sm:$0xf]
      %v204 = vld [vmem:[%s1 + $0x24] sm:$0xf]
      %v205 = vld [vmem:[%s1 + $0x28] sm:$0xf]
      %v206 = vld [vmem:[%s1 + $0x2c] sm:$0xf]
      %v207 = vld [vmem:[%s1 + $0x30] sm:$0xf]
      %v208 = vld [vmem:[%s1 + $0x34] sm:$0xf]
      %v209 = vld [vmem:[%s1 + $0x38] sm:$0xf]
      %v210 = vld [vmem:[%s1 + $0x3c] sm:$0xf]
      %v243 = vunpack.c.l.b16 %v163
      %v244 = vunpack.c.l.b16 %v164
      %v245 = vunpack.c.l.b16 %v165
      %v246 = vunpack.c.l.b16 %v166
      %v247 = vunpack.c.l.b16 %v167
      %v248 = vunpack.c.l.b16 %v168
      %v249 = vunpack.c.l.b16 %v169
      %v250 = vunpack.c.l.b16 %v170
      %v251 = vunpack.c.l.b16 %v171
      %v252 = vunpack.c.l.b16 %v172
      %v253 = vunpack.c.l.b16 %v173
      %v254 = vunpack.c.l.b16 %v174
      %v255 = vunpack.c.l.b16 %v175
      %v256 = vunpack.c.l.b16 %v176
      %v257 = vunpack.c.l.b16 %v177
      %v258 = vunpack.c.l.b16 %v178
      %v259 = vunpack.c.l.b16 %v179
      %v260 = vunpack.c.l.b16 %v180
      %v261 = vunpack.c.l.b16 %v181
      %v262 = vunpack.c.l.b16 %v182
      %v263 = vunpack.c.l.b16 %v183
      %v264 = vunpack.c.l.b16 %v184
      %v265 = vunpack.c.l.b16 %v185
      %v266 = vunpack.c.l.b16 %v186
      %v267 = vunpack.c.l.b16 %v187
      %v268 = vunpack.c.l.b16 %v188
      %v269 = vunpack.c.l.b16 %v189
      %v270 = vunpack.c.l.b16 %v190
      %v271 = vunpack.c.l.b16 %v191
      %v272 = vunpack.c.l.b16 %v192
      %v273 = vunpack.c.l.b16 %v193
      %v274 = vunpack.c.l.b16 %v194
      %v275 = vpack.c.b16 %v244, %v243
      %v276 = vpack.c.b16 %v246, %v245
      %v277 = vpack.c.b16 %v248, %v247
      %v278 = vpack.c.b16 %v250, %v249
      %v279 = vpack.c.b16 %v252, %v251
      %v280 = vpack.c.b16 %v254, %v253
      %v281 = vpack.c.b16 %v256, %v255
      %v282 = vpack.c.b16 %v258, %v257
      %v283 = vpack.c.b16 %v260, %v259
      %v284 = vpack.c.b16 %v262, %v261
      %v285 = vpack.c.b16 %v264, %v263
      %v286 = vpack.c.b16 %v266, %v265
      %v287 = vpack.c.b16 %v268, %v267
      %v288 = vpack.c.b16 %v270, %v269
      %v289 = vpack.c.b16 %v272, %v271
      %v290 = vpack.c.b16 %v274, %v273
      %v323 = vunpack.c.l.b16 %v195
      %v324 = vunpack.c.l.b16 %v196
      %v325 = vunpack.c.l.b16 %v197
      %v326 = vunpack.c.l.b16 %v198
      %v327 = vunpack.c.l.b16 %v199
      %v328 = vunpack.c.l.b16 %v200
      %v329 = vunpack.c.l.b16 %v201
      %v330 = vunpack.c.l.b16 %v202
      %v331 = vunpack.c.l.b16 %v203
      %v332 = vunpack.c.l.b16 %v204
      %v333 = vunpack.c.l.b16 %v205
      %v334 = vunpack.c.l.b16 %v206
      %v335 = vunpack.c.l.b16 %v207
      %v336 = vunpack.c.l.b16 %v208
      %v337 = vunpack.c.l.b16 %v209
      %v338 = vunpack.c.l.b16 %v210
      %v339 = vpack.c.b16 %v324, %v323
      %v340 = vpack.c.b16 %v326, %v325
      %v341 = vpack.c.b16 %v328, %v327
      %v342 = vpack.c.b16 %v330, %v329
      %v343 = vpack.c.b16 %v332, %v331
      %v344 = vpack.c.b16 %v334, %v333
      %v345 = vpack.c.b16 %v336, %v335
      %v346 = vpack.c.b16 %v338, %v337
      %355 = vmatprep.subr.bf16.mxu0 0
      %356 = vmatpush1.bf16.msra.mxu0 %v346
      %357 = vmatprep.subr.bf16.mxu0 0
      %358 = vmatpush1.bf16.msra.mxu0 %v345
      %359 = vmatprep.subr.bf16.mxu0 0
      %360 = vmatpush1.bf16.msra.mxu0 %v344
      %361 = vmatprep.subr.bf16.mxu0 0
      %362 = vmatpush1.bf16.msra.mxu0 %v343
      %363 = vmatprep.subr.bf16.mxu0 0
      %364 = vmatpush1.bf16.msra.mxu0 %v342
      %365 = vmatprep.subr.bf16.mxu0 0
      %366 = vmatpush1.bf16.msra.mxu0 %v341
      %367 = vmatprep.subr.bf16.mxu0 0
      %368 = vmatpush1.bf16.msra.mxu0 %v340
      %369 = vmatprep.subr.bf16.mxu0 0
      %370 = vmatpush1.bf16.msra.mxu0 %v339
      %371 = vmatprep.subr.bf16.mxu0 0
      %372 = vmatpush2.bf16.msra.mxu0 0
      %373 = vmatprep.subr.bf16.mxu0 0
      %374 = vmatpush2.bf16.msra.mxu0 0
      %375 = vmatprep.subr.bf16.mxu0 0
      %376 = vmatpush2.bf16.msra.mxu0 0
      %377 = vmatprep.subr.bf16.mxu0 0
      %378 = vmatpush2.bf16.msra.mxu0 0
      %379 = vmatprep.subr.bf16.mxu0 0
      %380 = vmatpush2.bf16.msra.mxu0 0
      %381 = vmatprep.subr.bf16.mxu0 0
      %382 = vmatpush2.bf16.msra.mxu0 0
      %383 = vmatprep.subr.bf16.mxu0 0
      %384 = vmatpush2.bf16.msra.mxu0 0
      %385 = vmatprep.subr.bf16.mxu0 0
      %386 = vmatpush2.bf16.msra.mxu0 0
      %387 = vmatprep.mubr.bf16.mxu0 0
      %388 = vmatmul.mubr.bf16.gmra.mxu0 %v275
      %v389 = vpop.f32.mrf.mxu0
      %v390 = vadd.f32 0.0, %v389
      %v391 = vpop.f32.mrf.mxu0
      %v392 = vpop.f32.mrf.mxu0
      %v393 = vadd.f32 0.0, %v392
      %v394 = vpop.f32.mrf.mxu0
      %395 = vmatprep.mubr.bf16.mxu0 0
      %396 = vmatmul.mubr.bf16.gmra.mxu0 %v276
      %v397 = vpop.f32.mrf.mxu0
      %v398 = vadd.f32 0.0, %v397
      %v399 = vpop.f32.mrf.mxu0
      %v400 = vpop.f32.mrf.mxu0
      %v401 = vadd.f32 0.0, %v400
      %v402 = vpop.f32.mrf.mxu0
      %403 = vmatprep.mubr.bf16.mxu0 0
      %404 = vmatmul.mubr.bf16.gmra.mxu0 %v277
      %v405 = vpop.f32.mrf.mxu0
      %v406 = vadd.f32 0.0, %v405
      %v407 = vpop.f32.mrf.mxu0
      %v408 = vpop.f32.mrf.mxu0
      %v409 = vadd.f32 0.0, %v408
      %v410 = vpop.f32.mrf.mxu0
      %411 = vmatprep.mubr.bf16.mxu0 0
      %412 = vmatmul.mubr.bf16.gmra.mxu0 %v278
      %v413 = vpop.f32.mrf.mxu0
      %v414 = vadd.f32 0.0, %v413
      %v415 = vpop.f32.mrf.mxu0
      %v416 = vpop.f32.mrf.mxu0
      %v417 = vadd.f32 0.0, %v416
      %v418 = vpop.f32.mrf.mxu0
      %419 = vmatprep.mubr.bf16.mxu0 0
      %420 = vmatmul.mubr.bf16.gmra.mxu0 %v279
      %v421 = vpop.f32.mrf.mxu0
      %v422 = vadd.f32 0.0, %v421
      %v423 = vpop.f32.mrf.mxu0
      %v424 = vpop.f32.mrf.mxu0
      %v425 = vadd.f32 0.0, %v424
      %v426 = vpop.f32.mrf.mxu0
      %427 = vmatprep.mubr.bf16.mxu0 0
      %428 = vmatmul.mubr.bf16.gmra.mxu0 %v280
      %v429 = vpop.f32.mrf.mxu0
      %v430 = vadd.f32 0.0, %v429
      %v431 = vpop.f32.mrf.mxu0
      %v432 = vpop.f32.mrf.mxu0
      %v433 = vadd.f32 0.0, %v432
      %v434 = vpop.f32.mrf.mxu0
      %435 = vmatprep.mubr.bf16.mxu0 0
      %436 = vmatmul.mubr.bf16.gmra.mxu0 %v281
      %v437 = vpop.f32.mrf.mxu0
      %v438 = vadd.f32 0.0, %v437
      %v439 = vpop.f32.mrf.mxu0
      %v440 = vpop.f32.mrf.mxu0
      %v441 = vadd.f32 0.0, %v440
      %v442 = vpop.f32.mrf.mxu0
      %443 = vmatprep.mubr.bf16.mxu0 0
      %444 = vmatmul.mubr.bf16.gmra.mxu0 %v282
      %v445 = vpop.f32.mrf.mxu0
      %v446 = vadd.f32 0.0, %v445
      %v447 = vpop.f32.mrf.mxu0
      %v448 = vpop.f32.mrf.mxu0
      %v449 = vadd.f32 0.0, %v448
      %v450 = vpop.f32.mrf.mxu0
      %451 = vmatprep.mubr.bf16.mxu0 0
      %452 = vmatmul.mubr.bf16.gmra.mxu0 %v283
      %v453 = vpop.f32.mrf.mxu0
      %v454 = vadd.f32 0.0, %v453
      %v455 = vpop.f32.mrf.mxu0
      %v456 = vpop.f32.mrf.mxu0
      %v457 = vadd.f32 0.0, %v456
      %v458 = vpop.f32.mrf.mxu0
      %459 = vmatprep.mubr.bf16.mxu0 0
      %460 = vmatmul.mubr.bf16.gmra.mxu0 %v284
      %v461 = vpop.f32.mrf.mxu0
      %v462 = vadd.f32 0.0, %v461
      %v463 = vpop.f32.mrf.mxu0
      %v464 = vpop.f32.mrf.mxu0
      %v465 = vadd.f32 0.0, %v464
      %v466 = vpop.f32.mrf.mxu0
      %467 = vmatprep.mubr.bf16.mxu0 0
      %468 = vmatmul.mubr.bf16.gmra.mxu0 %v285
      %v469 = vpop.f32.mrf.mxu0
      %v470 = vadd.f32 0.0, %v469
      %v471 = vpop.f32.mrf.mxu0
      %v472 = vpop.f32.mrf.mxu0
      %v473 = vadd.f32 0.0, %v472
      %v474 = vpop.f32.mrf.mxu0
      %475 = vmatprep.mubr.bf16.mxu0 0
      %476 = vmatmul.mubr.bf16.gmra.mxu0 %v286
      %v477 = vpop.f32.mrf.mxu0
      %v478 = vadd.f32 0.0, %v477
      %v479 = vpop.f32.mrf.mxu0
      %v480 = vpop.f32.mrf.mxu0
      %v481 = vadd.f32 0.0, %v480
      %v482 = vpop.f32.mrf.mxu0
      %483 = vmatprep.mubr.bf16.mxu0 0
      %484 = vmatmul.mubr.bf16.gmra.mxu0 %v287
      %v485 = vpop.f32.mrf.mxu0
      %v486 = vadd.f32 0.0, %v485
      %v487 = vpop.f32.mrf.mxu0
      %v488 = vpop.f32.mrf.mxu0
      %v489 = vadd.f32 0.0, %v488
      %v490 = vpop.f32.mrf.mxu0
      %491 = vmatprep.mubr.bf16.mxu0 0
      %492 = vmatmul.mubr.bf16.gmra.mxu0 %v288
      %v493 = vpop.f32.mrf.mxu0
      %v494 = vadd.f32 0.0, %v493
      %v495 = vpop.f32.mrf.mxu0
      %v496 = vpop.f32.mrf.mxu0
      %v497 = vadd.f32 0.0, %v496
      %v498 = vpop.f32.mrf.mxu0
      %499 = vmatprep.mubr.bf16.mxu0 0
      %500 = vmatmul.mubr.bf16.gmra.mxu0 %v289
      %v501 = vpop.f32.mrf.mxu0
      %v502 = vadd.f32 0.0, %v501
      %v503 = vpop.f32.mrf.mxu0
      %v504 = vpop.f32.mrf.mxu0
      %v505 = vadd.f32 0.0, %v504
      %v506 = vpop.f32.mrf.mxu0
      %507 = vmatprep.mubr.bf16.mxu0 0
      %508 = vmatmul.mubr.bf16.gmra.mxu0 %v290
      %v509 = vpop.f32.mrf.mxu0
      %v510 = vadd.f32 0.0, %v509
      %v511 = vpop.f32.mrf.mxu0
      %v512 = vpop.f32.mrf.mxu0
      %v513 = vadd.f32 0.0, %v512
      %v514 = vpop.f32.mrf.mxu0
      %515 = vdwg.mxu0
      %v516 = vld [vmem:[%s2] sm:$0x1]
      %v517 = vadd.f32 %v390, %v393
      %v518 = vadd.f32 %v517, %v398
      %v519 = vadd.f32 %v518, %v401
      %v520 = vadd.f32 %v519, %v406
      %v521 = vadd.f32 %v520, %v409
      %v522 = vadd.f32 %v521, %v414
      %v523 = vadd.f32 %v522, %v417
      %v524 = vadd.f32 %v523, %v422
      %v525 = vadd.f32 %v524, %v425
      %v526 = vadd.f32 %v525, %v430
      %v527 = vadd.f32 %v526, %v433
      %v528 = vadd.f32 %v527, %v438
      %v529 = vadd.f32 %v528, %v441
      %v530 = vadd.f32 %v529, %v446
      %v531 = vadd.f32 %v530, %v449
      %v532 = vadd.f32 %v531, %v454
      %v533 = vadd.f32 %v532, %v457
      %v534 = vadd.f32 %v533, %v462
      %v535 = vadd.f32 %v534, %v465
      %v536 = vadd.f32 %v535, %v470
      %v537 = vadd.f32 %v536, %v473
      %v538 = vadd.f32 %v537, %v478
      %v539 = vadd.f32 %v538, %v481
      %v540 = vadd.f32 %v539, %v486
      %v541 = vadd.f32 %v540, %v489
      %v542 = vadd.f32 %v541, %v494
      %v543 = vadd.f32 %v542, %v497
      %v544 = vadd.f32 %v543, %v502
      %v545 = vadd.f32 %v544, %v505
      %v546 = vadd.f32 %v545, %v510
      %v547 = vadd.f32 %v546, %v513
      %v548 = vrot.slane %v547, 4
      %v549 = vadd.f32 %v547, %v548
      %v550 = vrot.slane %v549, 2
      %v551 = vadd.f32 %v549, %v550
      %v552 = vrot.slane %v551, 1
      %v553 = vadd.f32 %v551, %v552
      %v554 = vadd.f32 %v516, %v553
      %555 = vst [vmem:[%s2] sm:$0x1] %v554
      %v556 = vld [vmem:[%s3] sm:$0x1]
      %v557 = vmul.f32 %v390, %v390
      %v558 = vmul.f32 %v393, %v393
      %v559 = vmul.f32 %v398, %v398
      %v560 = vmul.f32 %v401, %v401
      %v561 = vmul.f32 %v406, %v406
      %v562 = vmul.f32 %v409, %v409
      %v563 = vmul.f32 %v414, %v414
      %v564 = vmul.f32 %v417, %v417
      %v565 = vmul.f32 %v422, %v422
      %v566 = vmul.f32 %v425, %v425
      %v567 = vmul.f32 %v430, %v430
      %v568 = vmul.f32 %v433, %v433
      %v569 = vmul.f32 %v438, %v438
      %v570 = vmul.f32 %v441, %v441
      %v571 = vmul.f32 %v446, %v446
      %v572 = vmul.f32 %v449, %v449
      %v573 = vmul.f32 %v454, %v454
      %v574 = vmul.f32 %v457, %v457
      %v575 = vmul.f32 %v462, %v462
      %v576 = vmul.f32 %v465, %v465
      %v577 = vmul.f32 %v470, %v470
      %v578 = vmul.f32 %v473, %v473
      %v579 = vmul.f32 %v478, %v478
      %v580 = vmul.f32 %v481, %v481
      %v581 = vmul.f32 %v486, %v486
      %v582 = vmul.f32 %v489, %v489
      %v583 = vmul.f32 %v494, %v494
      %v584 = vmul.f32 %v497, %v497
      %v585 = vmul.f32 %v502, %v502
      %v586 = vmul.f32 %v505, %v505
      %v587 = vmul.f32 %v510, %v510
      %v588 = vmul.f32 %v513, %v513
      %v589 = vadd.f32 %v557, %v558
      %v590 = vadd.f32 %v589, %v559
      %v591 = vadd.f32 %v590, %v560
      %v592 = vadd.f32 %v591, %v561
      %v593 = vadd.f32 %v592, %v562
      %v594 = vadd.f32 %v593, %v563
      %v595 = vadd.f32 %v594, %v564
      %v596 = vadd.f32 %v595, %v565
      %v597 = vadd.f32 %v596, %v566
      %v598 = vadd.f32 %v597, %v567
      %v599 = vadd.f32 %v598, %v568
      %v600 = vadd.f32 %v599, %v569
      %v601 = vadd.f32 %v600, %v570
      %v602 = vadd.f32 %v601, %v571
      %v603 = vadd.f32 %v602, %v572
      %v604 = vadd.f32 %v603, %v573
      %v605 = vadd.f32 %v604, %v574
      %v606 = vadd.f32 %v605, %v575
      %v607 = vadd.f32 %v606, %v576
      %v608 = vadd.f32 %v607, %v577
      %v609 = vadd.f32 %v608, %v578
      %v610 = vadd.f32 %v609, %v579
      %v611 = vadd.f32 %v610, %v580
      %v612 = vadd.f32 %v611, %v581
      %v613 = vadd.f32 %v612, %v582
      %v614 = vadd.f32 %v613, %v583
      %v615 = vadd.f32 %v614, %v584
      %v616 = vadd.f32 %v615, %v585
      %v617 = vadd.f32 %v616, %v586
      %v618 = vadd.f32 %v617, %v587
      %v619 = vadd.f32 %v618, %v588
      %v620 = vrot.slane %v619, 4
      %v621 = vadd.f32 %v619, %v620
      %v622 = vrot.slane %v621, 2
      %v623 = vadd.f32 %v621, %v622
      %v624 = vrot.slane %v623, 1
      %v625 = vadd.f32 %v623, %v624
      %v626 = vadd.f32 %v556, %v625
      %627 = vst [vmem:[%s3] sm:$0x1] %v626
      // Predicated region
      $region33: #{cb2d_forward.2} parent=27 // pred_check
        %p628 = pneg %p75
      $region34: #{cb2d_forward.2} parent=27 // pred_check_branch
        %630 = sbr.rel (%p628) target = $region36
      $region35: #{cb2d_forward.2} parent=27 // pred_region
        _
      $region36: #{cb2d_forward.2} parent=27 // pred_fallthru
        _
      // Predicated region
      $region37: #{cb2d_forward.2} parent=27 // pred_check
        %p631 = pneg %p96
      $region38: #{cb2d_forward.2} parent=27 // pred_check_branch
        %633 = sbr.rel (%p631) target = $region40
      $region39: #{cb2d_forward.2} parent=27 // pred_region
        _
      $region40: #{cb2d_forward.2} parent=27 // pred_fallthru
        _
      // Predicated region
      $region41: #{cb2d_forward.2} parent=27 // pred_check
        %p634 = pneg %p75
      $region42: #{cb2d_forward.2} parent=27 // pred_check_branch
        %636 = sbr.rel (%p634) target = $region44
      $region43: #{cb2d_forward.2} parent=27 // pred_region
        _
      $region44: #{cb2d_forward.2} parent=27 // pred_fallthru
        _
      // Predicated region
      $region45: #{cb2d_forward.2} parent=27 // pred_check
        %p637 = pneg %p96
      $region46: #{cb2d_forward.2} parent=27 // pred_check_branch
        %639 = sbr.rel (%p637) target = $region48
      $region47: #{cb2d_forward.2} parent=27 // pred_region
        _
      $region48: #{cb2d_forward.2} parent=27 // pred_fallthru
        _
    $region28: #{cb2d_forward.2} parent=5 // pred_fallthru
      _
    %p640 = scmp.le.s32.totalorder 2, %s10
    // Predicated region
    $region49: #{cb2d_forward.2} parent=5 // pred_check
      %p641 = pneg %p640
    $region50: #{cb2d_forward.2} parent=5 // pred_check_branch
      %643 = sbr.rel (%p641) target = $region52
    $region51: #{cb2d_forward.2} parent=5 // pred_region
      %s644 = ssub.s32 %s10, 2
    $region52: #{cb2d_forward.2} parent=5 // pred_fallthru
      _
  $region6: #{cb2d_forward.2} parent=0 // loop_footer
    %s14 = sadd.s32 1, %s10
  $region7: #{cb2d_forward.2} parent=0 // loop_footer_branch
    %9 = sbr.rel target = $region3
  $region8: #{cb2d_forward.2} parent=0 // loop_exit
    _

// kernel: cb2d_forward.3
$region0: #{cb2d_forward.3}
  #allocation0 [shape = 'u32[]', space=smem, size = 0x4, offset = 0x4, fixed_abs, tag = 'smem constant byte address 0x4 - core index']
  #allocation1 [shape = 'u32[144,128]{1,0:T(1,128)}', space=vmem, size = 0x12000, scoped, tag = 'internal scratch']
  %s0 = inlined_call_operand.vmem [shape: bf16[512,128], index: 0, kind: input, shape index: {}]
  %s1 = inlined_call_operand.vmem [shape: bf16[128,128], index: 1, kind: input, shape index: {}]
  %s2 = inlined_call_operand.vmem [shape: f32[1,128], index: 2, kind: input, shape index: {}]
  %s3 = inlined_call_operand.vmem [shape: f32[1,128], index: 3, kind: input, shape index: {}]
  %s4 = inlined_call_operand.vmem [shape: f32[512,128], index: 4, kind: output, shape index: {}]
  %s5 = sld [smem:[#allocation0]]
  $region49: #{cb2d_forward.3} parent=0
    _
  %s7 = ssub.s32 1, %s5
  %s8 = scalar_select 0, %s7, %s5
  loop: start=0, step=1, limit=4
  $region2: #{cb2d_forward.3} parent=0 // loop_pre_header
    _
  $region3: #{cb2d_forward.3} parent=0 // loop_header
    %s10 = sphi 0, %s14
    %p11 = scmp.ge.s32.totalorder %s10, 4
    %s20 = sphi 0, %s22
    %s23 = sphi 0, %s20
    %s24 = sphi 0, %s23
    %s40 = sphi 0, %s24
    %s44 = sphi 0, %s44
    %s46 = sphi 0, %s44
    %s47 = sphi 0, %s46
    %s61 = sphi 0, %s47
    %s65 = sphi 0, %s65
    %s67 = sphi 0, %s65
    %s68 = sphi 0, %s67
    %s82 = sphi 0, %s68
    %s86 = sphi 0, %s86
    %s88 = sphi 0, %s86
    %s89 = sphi 0, %s88
    %s103 = sphi 0, %s89
    %s109 = sphi 0, %s111
    %s112 = sphi 0, %s109
    %s113 = sphi 0, %s112
    %s129 = sphi 0, %s113
  $region4: #{cb2d_forward.3} parent=0 // loop_header_branch
    %13 = sbr.rel (%p11) target = $region8
  $region5: #{cb2d_forward.3} parent=0 // loop_body
    %s15 = ssub.s32 %s10, 1
    %s16 = ssub.s32 %s10, 2
    %s17 = sadd.s32 %s10, 1
    %s18 = ssub.s32 %s10, %s17
    %p19 = scmp.eq.s32.totalorder %s18, 0
    %s21 = sadd.s32 %s20, 1
    %s22 = scalar_select %p19, %s20, %s21
    %p25 = pneg %p19
    %p26 = scmp.eq.s32.totalorder %s10, 1
    %p27 = por %p25, %p26
    %p28 = scmp.ne.s32.totalorder %s20, %s23
    %p29 = scmp.eq.s32.totalorder %s10, 0
    %p30 = por %p28, %p29
    %p31 = scmp.ne.s32.totalorder %s20, %s23
    %p32 = scmp.eq.s32.totalorder %s15, 1
    %p33 = por %p31, %p32
    %p34 = scmp.ne.s32.totalorder %s23, %s24
    %p35 = scmp.eq.s32.totalorder %s15, 0
    %p36 = por %p34, %p35
    %p37 = scmp.ne.s32.totalorder %s23, %s24
    %p38 = scmp.eq.s32.totalorder %s16, 1
    %p39 = por %p37, %p38
    %p41 = scmp.ne.s32.totalorder %s24, %s40
    %p42 = scmp.eq.s32.totalorder %s16, 0
    %p43 = por %p41, %p42
    %s45 = sadd.s32 %s44, 1
    %p48 = scmp.eq.s32.totalorder %s10, 1
    %p49 = scmp.ne.s32.totalorder %s44, %s46
    %p50 = scmp.eq.s32.totalorder %s10, 0
    %p51 = por %p49, %p50
    %p52 = scmp.ne.s32.totalorder %s44, %s46
    %p53 = scmp.eq.s32.totalorder %s15, 1
    %p54 = por %p52, %p53
    %p55 = scmp.ne.s32.totalorder %s46, %s47
    %p56 = scmp.eq.s32.totalorder %s15, 0
    %p57 = por %p55, %p56
    %p58 = scmp.ne.s32.totalorder %s46, %s47
    %p59 = scmp.eq.s32.totalorder %s16, 1
    %p60 = por %p58, %p59
    %p62 = scmp.ne.s32.totalorder %s47, %s61
    %p63 = scmp.eq.s32.totalorder %s16, 0
    %p64 = por %p62, %p63
    %s66 = sadd.s32 %s65, 1
    %p69 = scmp.eq.s32.totalorder %s10, 1
    %p70 = scmp.ne.s32.totalorder %s65, %s67
    %p71 = scmp.eq.s32.totalorder %s10, 0
    %p72 = por %p70, %p71
    %p73 = scmp.ne.s32.totalorder %s65, %s67
    %p74 = scmp.eq.s32.totalorder %s15, 1
    %p75 = por %p73, %p74
    %p76 = scmp.ne.s32.totalorder %s67, %s68
    %p77 = scmp.eq.s32.totalorder %s15, 0
    %p78 = por %p76, %p77
    %p79 = scmp.ne.s32.totalorder %s67, %s68
    %p80 = scmp.eq.s32.totalorder %s16, 1
    %p81 = por %p79, %p80
    %p83 = scmp.ne.s32.totalorder %s68, %s82
    %p84 = scmp.eq.s32.totalorder %s16, 0
    %p85 = por %p83, %p84
    %s87 = sadd.s32 %s86, 1
    %p90 = scmp.eq.s32.totalorder %s10, 1
    %p91 = scmp.ne.s32.totalorder %s86, %s88
    %p92 = scmp.eq.s32.totalorder %s10, 0
    %p93 = por %p91, %p92
    %p94 = scmp.ne.s32.totalorder %s86, %s88
    %p95 = scmp.eq.s32.totalorder %s15, 1
    %p96 = por %p94, %p95
    %p97 = scmp.ne.s32.totalorder %s88, %s89
    %p98 = scmp.eq.s32.totalorder %s15, 0
    %p99 = por %p97, %p98
    %p100 = scmp.ne.s32.totalorder %s88, %s89
    %p101 = scmp.eq.s32.totalorder %s16, 1
    %p102 = por %p100, %p101
    %p104 = scmp.ne.s32.totalorder %s89, %s103
    %p105 = scmp.eq.s32.totalorder %s16, 0
    %p106 = por %p104, %p105
    %s107 = ssub.s32 %s10, %s17
    %p108 = scmp.eq.s32.totalorder %s107, 0
    %s110 = sadd.s32 %s109, 1
    %s111 = scalar_select %p108, %s109, %s110
    %p114 = pneg %p108
    %p115 = scmp.eq.s32.totalorder %s10, 1
    %p116 = por %p114, %p115
    %p117 = scmp.ne.s32.totalorder %s109, %s112
    %p118 = scmp.eq.s32.totalorder %s10, 0
    %p119 = por %p117, %p118
    %p120 = scmp.ne.s32.totalorder %s109, %s112
    %p121 = scmp.eq.s32.totalorder %s15, 1
    %p122 = por %p120, %p121
    %p123 = scmp.ne.s32.totalorder %s112, %s113
    %p124 = scmp.eq.s32.totalorder %s15, 0
    %p125 = por %p123, %p124
    %p126 = scmp.ne.s32.totalorder %s112, %s113
    %p127 = scmp.eq.s32.totalorder %s16, 1
    %p128 = por %p126, %p127
    %p130 = scmp.ne.s32.totalorder %s113, %s129
    %p131 = scmp.eq.s32.totalorder %s16, 0
    %p132 = por %p130, %p131
    %p133 = scmp.le.s32.totalorder 1, %s10
    %p134 = scmp.lt.s32.totalorder %s10, 3
    %p135 = pnand %p133, %p134
    %p136 = pneg %p135
    // Predicated region
    $region9: #{cb2d_forward.3} parent=5 // pred_check
      _
    $region10: #{cb2d_forward.3} parent=5 // pred_check_branch
      %138 = sbr.rel (%p135) target = $region12
    $region11: #{cb2d_forward.3} parent=5 // pred_region
      %s139 = ssub.s32 %s10, 1
      // Predicated region
      $region13: #{cb2d_forward.3} parent=11 // pred_check
        %p140 = pneg %p57
      $region14: #{cb2d_forward.3} parent=11 // pred_check_branch
        %142 = sbr.rel (%p140) target = $region16
      $region15: #{cb2d_forward.3} parent=11 // pred_region
        _
      $region16: #{cb2d_forward.3} parent=11 // pred_fallthru
        _
      // Predicated region
      $region17: #{cb2d_forward.3} parent=11 // pred_check
        %p143 = pneg %p78
      $region18: #{cb2d_forward.3} parent=11 // pred_check_branch
        %145 = sbr.rel (%p143) target = $region20
      $region19: #{cb2d_forward.3} parent=11 // pred_region
        _
      $region20: #{cb2d_forward.3} parent=11 // pred_fallthru
        _
      // Predicated region
      $region21: #{cb2d_forward.3} parent=11 // pred_check
        %p146 = pneg %p99
      $region22: #{cb2d_forward.3} parent=11 // pred_check_branch
        %148 = sbr.rel (%p146) target = $region24
      $region23: #{cb2d_forward.3} parent=11 // pred_region
        _
      $region24: #{cb2d_forward.3} parent=11 // pred_fallthru
        _
    $region12: #{cb2d_forward.3} parent=5 // pred_fallthru
      _
    %p149 = scmp.lt.s32.totalorder %s10, 2
    // Predicated region
    $region25: #{cb2d_forward.3} parent=5 // pred_check
      %p150 = pneg %p149
    $region26: #{cb2d_forward.3} parent=5 // pred_check_branch
      %152 = sbr.rel (%p150) target = $region28
    $region27: #{cb2d_forward.3} parent=5 // pred_region
      // Predicated region
      $region29: #{cb2d_forward.3} parent=27 // pred_check
        %p153 = pneg %p30
      $region30: #{cb2d_forward.3} parent=27 // pred_check_branch
        %155 = sbr.rel (%p153) target = $region32
      $region31: #{cb2d_forward.3} parent=27 // pred_region
        %s156 = smul.u32 32, %s10
        %p157 = scmp.lt.s32.totalorder %s156, 63
        %s158 = scalar_select %p157, %s156, 63
        %s159 = smul.addr %s158, 4
        %s160 = scalar_lea.vmem %s0, %s159
        %s161 = smul.u32 32, %s10
      $region32: #{cb2d_forward.3} parent=27 // pred_fallthru
        _
    $region28: #{cb2d_forward.3} parent=5 // pred_fallthru
      _
    %p162 = scmp.le.s32.totalorder 1, %s10
    %p163 = scmp.lt.s32.totalorder %s10, 3
    %p164 = pnand %p162, %p163
    %p165 = pneg %p164
    // Predicated region
    $region33: #{cb2d_forward.3} parent=5 // pred_check
      _
    $region34: #{cb2d_forward.3} parent=5 // pred_check_branch
      %167 = sbr.rel (%p164) target = $region36
    $region35: #{cb2d_forward.3} parent=5 // pred_region
      %s168 = ssub.s32 %s10, 1
      %s169 = smul.u32 32, %s15
      %p170 = scmp.lt.s32.totalorder %s169, 63
      %s171 = scalar_select %p170, %s169, 63
      %s172 = smul.addr %s171, 4
      %s173 = scalar_lea.vmem %s0, %s172
      %p174 = pneg %p36
      %p175 = pneg %p33
      %p176 = pneg %p57
      %p177 = pneg %p54
      %p178 = pneg %p78
      %p179 = pneg %p75
      %p180 = pneg %p99
      %p181 = pneg %p96
      %p182 = pneg %p125
      %p183 = pneg %p122
      %s184 = smul.u32 32, %s15
      %p185 = scmp.lt.s32.totalorder %s184, 63
      %s186 = scalar_select %p185, %s184, 63
      %s187 = smul.addr %s186, 8
      %s188 = scalar_lea.vmem %s4, %s187
      %s189 = smul.u32 32, %s15
      %p190 = scmp.lt.s32.totalorder %s189, 63
      %s191 = scalar_select %p190, %s189, 63
      %s192 = smul.addr %s191, 4
      %s193 = scalar_lea.vmem %s0, %s192
      %s194 = smul.u32 32, %s15
      %s195 = smul.u32 32, %s15
      %p196 = scmp.lt.s32.totalorder %s195, 63
      %s197 = scalar_select %p196, %s195, 63
      %s198 = smul.addr %s197, 8
      %s199 = scalar_lea.vmem %s4, %s198
      %s200 = smul.u32 32, %s15
      %v202 = vld [vmem:[%s193] sm:$0xf]
      %v203 = vld [vmem:[%s193 + $0x4] sm:$0xf]
      %v204 = vld [vmem:[%s193 + $0x8] sm:$0xf]
      %v205 = vld [vmem:[%s193 + $0xc] sm:$0xf]
      %v206 = vld [vmem:[%s193 + $0x10] sm:$0xf]
      %v207 = vld [vmem:[%s193 + $0x14] sm:$0xf]
      %v208 = vld [vmem:[%s193 + $0x18] sm:$0xf]
      %v209 = vld [vmem:[%s193 + $0x1c] sm:$0xf]
      %v210 = vld [vmem:[%s193 + $0x20] sm:$0xf]
      %v211 = vld [vmem:[%s193 + $0x24] sm:$0xf]
      %v212 = vld [vmem:[%s193 + $0x28] sm:$0xf]
      %v213 = vld [vmem:[%s193 + $0x2c] sm:$0xf]
      %v214 = vld [vmem:[%s193 + $0x30] sm:$0xf]
      %v215 = vld [vmem:[%s193 + $0x34] sm:$0xf]
      %v216 = vld [vmem:[%s193 + $0x38] sm:$0xf]
      %v217 = vld [vmem:[%s193 + $0x3c] sm:$0xf]
      %v218 = vld [vmem:[%s193 + $0x40] sm:$0xf]
      %v219 = vld [vmem:[%s193 + $0x44] sm:$0xf]
      %v220 = vld [vmem:[%s193 + $0x48] sm:$0xf]
      %v221 = vld [vmem:[%s193 + $0x4c] sm:$0xf]
      %v222 = vld [vmem:[%s193 + $0x50] sm:$0xf]
      %v223 = vld [vmem:[%s193 + $0x54] sm:$0xf]
      %v224 = vld [vmem:[%s193 + $0x58] sm:$0xf]
      %v225 = vld [vmem:[%s193 + $0x5c] sm:$0xf]
      %v226 = vld [vmem:[%s193 + $0x60] sm:$0xf]
      %v227 = vld [vmem:[%s193 + $0x64] sm:$0xf]
      %v228 = vld [vmem:[%s193 + $0x68] sm:$0xf]
      %v229 = vld [vmem:[%s193 + $0x6c] sm:$0xf]
      %v230 = vld [vmem:[%s193 + $0x70] sm:$0xf]
      %v231 = vld [vmem:[%s193 + $0x74] sm:$0xf]
      %v232 = vld [vmem:[%s193 + $0x78] sm:$0xf]
      %v233 = vld [vmem:[%s193 + $0x7c] sm:$0xf]
      %v234 = vld [vmem:[%s1] sm:$0xf]
      %v235 = vld [vmem:[%s1 + $0x4] sm:$0xf]
      %v236 = vld [vmem:[%s1 + $0x8] sm:$0xf]
      %v237 = vld [vmem:[%s1 + $0xc] sm:$0xf]
      %v238 = vld [vmem:[%s1 + $0x10] sm:$0xf]
      %v239 = vld [vmem:[%s1 + $0x14] sm:$0xf]
      %v240 = vld [vmem:[%s1 + $0x18] sm:$0xf]
      %v241 = vld [vmem:[%s1 + $0x1c] sm:$0xf]
      %v242 = vld [vmem:[%s1 + $0x20] sm:$0xf]
      %v243 = vld [vmem:[%s1 + $0x24] sm:$0xf]
      %v244 = vld [vmem:[%s1 + $0x28] sm:$0xf]
      %v245 = vld [vmem:[%s1 + $0x2c] sm:$0xf]
      %v246 = vld [vmem:[%s1 + $0x30] sm:$0xf]
      %v247 = vld [vmem:[%s1 + $0x34] sm:$0xf]
      %v248 = vld [vmem:[%s1 + $0x38] sm:$0xf]
      %v249 = vld [vmem:[%s1 + $0x3c] sm:$0xf]
      %v282 = vunpack.c.l.b16 %v202
      %v283 = vunpack.c.l.b16 %v203
      %v284 = vunpack.c.l.b16 %v204
      %v285 = vunpack.c.l.b16 %v205
      %v286 = vunpack.c.l.b16 %v206
      %v287 = vunpack.c.l.b16 %v207
      %v288 = vunpack.c.l.b16 %v208
      %v289 = vunpack.c.l.b16 %v209
      %v290 = vunpack.c.l.b16 %v210
      %v291 = vunpack.c.l.b16 %v211
      %v292 = vunpack.c.l.b16 %v212
      %v293 = vunpack.c.l.b16 %v213
      %v294 = vunpack.c.l.b16 %v214
      %v295 = vunpack.c.l.b16 %v215
      %v296 = vunpack.c.l.b16 %v216
      %v297 = vunpack.c.l.b16 %v217
      %v298 = vunpack.c.l.b16 %v218
      %v299 = vunpack.c.l.b16 %v219
      %v300 = vunpack.c.l.b16 %v220
      %v301 = vunpack.c.l.b16 %v221
      %v302 = vunpack.c.l.b16 %v222
      %v303 = vunpack.c.l.b16 %v223
      %v304 = vunpack.c.l.b16 %v224
      %v305 = vunpack.c.l.b16 %v225
      %v306 = vunpack.c.l.b16 %v226
      %v307 = vunpack.c.l.b16 %v227
      %v308 = vunpack.c.l.b16 %v228
      %v309 = vunpack.c.l.b16 %v229
      %v310 = vunpack.c.l.b16 %v230
      %v311 = vunpack.c.l.b16 %v231
      %v312 = vunpack.c.l.b16 %v232
      %v313 = vunpack.c.l.b16 %v233
      %v314 = vpack.c.b16 %v283, %v282
      %v315 = vpack.c.b16 %v285, %v284
      %v316 = vpack.c.b16 %v287, %v286
      %v317 = vpack.c.b16 %v289, %v288
      %v318 = vpack.c.b16 %v291, %v290
      %v319 = vpack.c.b16 %v293, %v292
      %v320 = vpack.c.b16 %v295, %v294
      %v321 = vpack.c.b16 %v297, %v296
      %v322 = vpack.c.b16 %v299, %v298
      %v323 = vpack.c.b16 %v301, %v300
      %v324 = vpack.c.b16 %v303, %v302
      %v325 = vpack.c.b16 %v305, %v304
      %v326 = vpack.c.b16 %v307, %v306
      %v327 = vpack.c.b16 %v309, %v308
      %v328 = vpack.c.b16 %v311, %v310
      %v329 = vpack.c.b16 %v313, %v312
      %v362 = vunpack.c.l.b16 %v234
      %v363 = vunpack.c.l.b16 %v235
      %v364 = vunpack.c.l.b16 %v236
      %v365 = vunpack.c.l.b16 %v237
      %v366 = vunpack.c.l.b16 %v238
      %v367 = vunpack.c.l.b16 %v239
      %v368 = vunpack.c.l.b16 %v240
      %v369 = vunpack.c.l.b16 %v241
      %v370 = vunpack.c.l.b16 %v242
      %v371 = vunpack.c.l.b16 %v243
      %v372 = vunpack.c.l.b16 %v244
      %v373 = vunpack.c.l.b16 %v245
      %v374 = vunpack.c.l.b16 %v246
      %v375 = vunpack.c.l.b16 %v247
      %v376 = vunpack.c.l.b16 %v248
      %v377 = vunpack.c.l.b16 %v249
      %v378 = vpack.c.b16 %v363, %v362
      %v379 = vpack.c.b16 %v365, %v364
      %v380 = vpack.c.b16 %v367, %v366
      %v381 = vpack.c.b16 %v369, %v368
      %v382 = vpack.c.b16 %v371, %v370
      %v383 = vpack.c.b16 %v373, %v372
      %v384 = vpack.c.b16 %v375, %v374
      %v385 = vpack.c.b16 %v377, %v376
      %394 = vmatprep.subr.bf16.mxu0 0
      %395 = vmatpush1.bf16.msra.mxu0 %v385
      %396 = vmatprep.subr.bf16.mxu0 0
      %397 = vmatpush1.bf16.msra.mxu0 %v384
      %398 = vmatprep.subr.bf16.mxu0 0
      %399 = vmatpush1.bf16.msra.mxu0 %v383
      %400 = vmatprep.subr.bf16.mxu0 0
      %401 = vmatpush1.bf16.msra.mxu0 %v382
      %402 = vmatprep.subr.bf16.mxu0 0
      %403 = vmatpush1.bf16.msra.mxu0 %v381
      %404 = vmatprep.subr.bf16.mxu0 0
      %405 = vmatpush1.bf16.msra.mxu0 %v380
      %406 = vmatprep.subr.bf16.mxu0 0
      %407 = vmatpush1.bf16.msra.mxu0 %v379
      %408 = vmatprep.subr.bf16.mxu0 0
      %409 = vmatpush1.bf16.msra.mxu0 %v378
      %410 = vmatprep.subr.bf16.mxu0 0
      %411 = vmatpush2.bf16.msra.mxu0 0
      %412 = vmatprep.subr.bf16.mxu0 0
      %413 = vmatpush2.bf16.msra.mxu0 0
      %414 = vmatprep.subr.bf16.mxu0 0
      %415 = vmatpush2.bf16.msra.mxu0 0
      %416 = vmatprep.subr.bf16.mxu0 0
      %417 = vmatpush2.bf16.msra.mxu0 0
      %418 = vmatprep.subr.bf16.mxu0 0
      %419 = vmatpush2.bf16.msra.mxu0 0
      %420 = vmatprep.subr.bf16.mxu0 0
      %421 = vmatpush2.bf16.msra.mxu0 0
      %422 = vmatprep.subr.bf16.mxu0 0
      %423 = vmatpush2.bf16.msra.mxu0 0
      %424 = vmatprep.subr.bf16.mxu0 0
      %425 = vmatpush2.bf16.msra.mxu0 0
      %426 = vmatprep.mubr.bf16.mxu0 0
      %427 = vmatmul.mubr.bf16.gmra.mxu0 %v314
      %v428 = vpop.f32.mrf.mxu0
      %v429 = vadd.f32 0.0, %v428
      %v430 = vpop.f32.mrf.mxu0
      %v431 = vpop.f32.mrf.mxu0
      %v432 = vadd.f32 0.0, %v431
      %v433 = vpop.f32.mrf.mxu0
      %434 = vmatprep.mubr.bf16.mxu0 0
      %435 = vmatmul.mubr.bf16.gmra.mxu0 %v315
      %v436 = vpop.f32.mrf.mxu0
      %v437 = vadd.f32 0.0, %v436
      %v438 = vpop.f32.mrf.mxu0
      %v439 = vpop.f32.mrf.mxu0
      %v440 = vadd.f32 0.0, %v439
      %v441 = vpop.f32.mrf.mxu0
      %442 = vmatprep.mubr.bf16.mxu0 0
      %443 = vmatmul.mubr.bf16.gmra.mxu0 %v316
      %v444 = vpop.f32.mrf.mxu0
      %v445 = vadd.f32 0.0, %v444
      %v446 = vpop.f32.mrf.mxu0
      %v447 = vpop.f32.mrf.mxu0
      %v448 = vadd.f32 0.0, %v447
      %v449 = vpop.f32.mrf.mxu0
      %450 = vmatprep.mubr.bf16.mxu0 0
      %451 = vmatmul.mubr.bf16.gmra.mxu0 %v317
      %v452 = vpop.f32.mrf.mxu0
      %v453 = vadd.f32 0.0, %v452
      %v454 = vpop.f32.mrf.mxu0
      %v455 = vpop.f32.mrf.mxu0
      %v456 = vadd.f32 0.0, %v455
      %v457 = vpop.f32.mrf.mxu0
      %458 = vmatprep.mubr.bf16.mxu0 0
      %459 = vmatmul.mubr.bf16.gmra.mxu0 %v318
      %v460 = vpop.f32.mrf.mxu0
      %v461 = vadd.f32 0.0, %v460
      %v462 = vpop.f32.mrf.mxu0
      %v463 = vpop.f32.mrf.mxu0
      %v464 = vadd.f32 0.0, %v463
      %v465 = vpop.f32.mrf.mxu0
      %466 = vmatprep.mubr.bf16.mxu0 0
      %467 = vmatmul.mubr.bf16.gmra.mxu0 %v319
      %v468 = vpop.f32.mrf.mxu0
      %v469 = vadd.f32 0.0, %v468
      %v470 = vpop.f32.mrf.mxu0
      %v471 = vpop.f32.mrf.mxu0
      %v472 = vadd.f32 0.0, %v471
      %v473 = vpop.f32.mrf.mxu0
      %474 = vmatprep.mubr.bf16.mxu0 0
      %475 = vmatmul.mubr.bf16.gmra.mxu0 %v320
      %v476 = vpop.f32.mrf.mxu0
      %v477 = vadd.f32 0.0, %v476
      %v478 = vpop.f32.mrf.mxu0
      %v479 = vpop.f32.mrf.mxu0
      %v480 = vadd.f32 0.0, %v479
      %v481 = vpop.f32.mrf.mxu0
      %482 = vmatprep.mubr.bf16.mxu0 0
      %483 = vmatmul.mubr.bf16.gmra.mxu0 %v321
      %v484 = vpop.f32.mrf.mxu0
      %v485 = vadd.f32 0.0, %v484
      %v486 = vpop.f32.mrf.mxu0
      %v487 = vpop.f32.mrf.mxu0
      %v488 = vadd.f32 0.0, %v487
      %v489 = vpop.f32.mrf.mxu0
      %490 = vmatprep.mubr.bf16.mxu0 0
      %491 = vmatmul.mubr.bf16.gmra.mxu0 %v322
      %v492 = vpop.f32.mrf.mxu0
      %v493 = vadd.f32 0.0, %v492
      %v494 = vpop.f32.mrf.mxu0
      %v495 = vpop.f32.mrf.mxu0
      %v496 = vadd.f32 0.0, %v495
      %v497 = vpop.f32.mrf.mxu0
      %498 = vmatprep.mubr.bf16.mxu0 0
      %499 = vmatmul.mubr.bf16.gmra.mxu0 %v323
      %v500 = vpop.f32.mrf.mxu0
      %v501 = vadd.f32 0.0, %v500
      %v502 = vpop.f32.mrf.mxu0
      %v503 = vpop.f32.mrf.mxu0
      %v504 = vadd.f32 0.0, %v503
      %v505 = vpop.f32.mrf.mxu0
      %506 = vmatprep.mubr.bf16.mxu0 0
      %507 = vmatmul.mubr.bf16.gmra.mxu0 %v324
      %v508 = vpop.f32.mrf.mxu0
      %v509 = vadd.f32 0.0, %v508
      %v510 = vpop.f32.mrf.mxu0
      %v511 = vpop.f32.mrf.mxu0
      %v512 = vadd.f32 0.0, %v511
      %v513 = vpop.f32.mrf.mxu0
      %514 = vmatprep.mubr.bf16.mxu0 0
      %515 = vmatmul.mubr.bf16.gmra.mxu0 %v325
      %v516 = vpop.f32.mrf.mxu0
      %v517 = vadd.f32 0.0, %v516
      %v518 = vpop.f32.mrf.mxu0
      %v519 = vpop.f32.mrf.mxu0
      %v520 = vadd.f32 0.0, %v519
      %v521 = vpop.f32.mrf.mxu0
      %522 = vmatprep.mubr.bf16.mxu0 0
      %523 = vmatmul.mubr.bf16.gmra.mxu0 %v326
      %v524 = vpop.f32.mrf.mxu0
      %v525 = vadd.f32 0.0, %v524
      %v526 = vpop.f32.mrf.mxu0
      %v527 = vpop.f32.mrf.mxu0
      %v528 = vadd.f32 0.0, %v527
      %v529 = vpop.f32.mrf.mxu0
      %530 = vmatprep.mubr.bf16.mxu0 0
      %531 = vmatmul.mubr.bf16.gmra.mxu0 %v327
      %v532 = vpop.f32.mrf.mxu0
      %v533 = vadd.f32 0.0, %v532
      %v534 = vpop.f32.mrf.mxu0
      %v535 = vpop.f32.mrf.mxu0
      %v536 = vadd.f32 0.0, %v535
      %v537 = vpop.f32.mrf.mxu0
      %538 = vmatprep.mubr.bf16.mxu0 0
      %539 = vmatmul.mubr.bf16.gmra.mxu0 %v328
      %v540 = vpop.f32.mrf.mxu0
      %v541 = vadd.f32 0.0, %v540
      %v542 = vpop.f32.mrf.mxu0
      %v543 = vpop.f32.mrf.mxu0
      %v544 = vadd.f32 0.0, %v543
      %v545 = vpop.f32.mrf.mxu0
      %546 = vmatprep.mubr.bf16.mxu0 0
      %547 = vmatmul.mubr.bf16.gmra.mxu0 %v329
      %v548 = vpop.f32.mrf.mxu0
      %v549 = vadd.f32 0.0, %v548
      %v550 = vpop.f32.mrf.mxu0
      %v551 = vpop.f32.mrf.mxu0
      %v552 = vadd.f32 0.0, %v551
      %v553 = vpop.f32.mrf.mxu0
      %554 = vdwg.mxu0
      %v555 = vld [vmem:[%s2] sm:$0x1]
      %v557 = vlaneseq
      %v558 = vshrl.u32 %v557, 7
      %v559 = vsub.s32 0, %v558
      %v560 = vrot.slane %v555, %v559
      %v562 = vmul.f32 %v429, %v560
      %v563 = vmul.f32 %v432, %v560
      %v564 = vmul.f32 %v437, %v560
      %v565 = vmul.f32 %v440, %v560
      %v566 = vmul.f32 %v445, %v560
      %v567 = vmul.f32 %v448, %v560
      %v568 = vmul.f32 %v453, %v560
      %v569 = vmul.f32 %v456, %v560
      %v570 = vmul.f32 %v461, %v560
      %v571 = vmul.f32 %v464, %v560
      %v572 = vmul.f32 %v469, %v560
      %v573 = vmul.f32 %v472, %v560
      %v574 = vmul.f32 %v477, %v560
      %v575 = vmul.f32 %v480, %v560
      %v576 = vmul.f32 %v485, %v560
      %v577 = vmul.f32 %v488, %v560
      %v578 = vmul.f32 %v493, %v560
      %v579 = vmul.f32 %v496, %v560
      %v580 = vmul.f32 %v501, %v560
      %v581 = vmul.f32 %v504, %v560
      %v582 = vmul.f32 %v509, %v560
      %v583 = vmul.f32 %v512, %v560
      %v584 = vmul.f32 %v517, %v560
      %v585 = vmul.f32 %v520, %v560
      %v586 = vmul.f32 %v525, %v560
      %v587 = vmul.f32 %v528, %v560
      %v588 = vmul.f32 %v533, %v560
      %v589 = vmul.f32 %v536, %v560
      %v590 = vmul.f32 %v541, %v560
      %v591 = vmul.f32 %v544, %v560
      %v592 = vmul.f32 %v549, %v560
      %v593 = vmul.f32 %v552, %v560
      %v594 = vld [vmem:[%s3] sm:$0x1]
      %v596 = vlaneseq
      %v597 = vshrl.u32 %v596, 7
      %v598 = vsub.s32 0, %v597
      %v599 = vrot.slane %v594, %v598
      %v601 = vadd.f32 %v562, %v599
      %v602 = vadd.f32 %v563, %v599
      %v603 = vadd.f32 %v564, %v599
      %v604 = vadd.f32 %v565, %v599
      %v605 = vadd.f32 %v566, %v599
      %v606 = vadd.f32 %v567, %v599
      %v607 = vadd.f32 %v568, %v599
      %v608 = vadd.f32 %v569, %v599
      %v609 = vadd.f32 %v570, %v599
      %v610 = vadd.f32 %v571, %v599
      %v611 = vadd.f32 %v572, %v599
      %v612 = vadd.f32 %v573, %v599
      %v613 = vadd.f32 %v574, %v599
      %v614 = vadd.f32 %v575, %v599
      %v615 = vadd.f32 %v576, %v599
      %v616 = vadd.f32 %v577, %v599
      %v617 = vadd.f32 %v578, %v599
      %v618 = vadd.f32 %v579, %v599
      %v619 = vadd.f32 %v580, %v599
      %v620 = vadd.f32 %v581, %v599
      %v621 = vadd.f32 %v582, %v599
      %v622 = vadd.f32 %v583, %v599
      %v623 = vadd.f32 %v584, %v599
      %v624 = vadd.f32 %v585, %v599
      %v625 = vadd.f32 %v586, %v599
      %v626 = vadd.f32 %v587, %v599
      %v627 = vadd.f32 %v588, %v599
      %v628 = vadd.f32 %v589, %v599
      %v629 = vadd.f32 %v590, %v599
      %v630 = vadd.f32 %v591, %v599
      %v631 = vadd.f32 %v592, %v599
      %v632 = vadd.f32 %v593, %v599
      %633 = vst [vmem:[%s199] sm:$0xff] %v601
      %634 = vst [vmem:[%s199 + $0x8] sm:$0xff] %v602
      %635 = vst [vmem:[%s199 + $0x10] sm:$0xff] %v603
      %636 = vst [vmem:[%s199 + $0x18] sm:$0xff] %v604
      %637 = vst [vmem:[%s199 + $0x20] sm:$0xff] %v605
      %638 = vst [vmem:[%s199 + $0x28] sm:$0xff] %v606
      %639 = vst [vmem:[%s199 + $0x30] sm:$0xff] %v607
      %640 = vst [vmem:[%s199 + $0x38] sm:$0xff] %v608
      %641 = vst [vmem:[%s199 + $0x40] sm:$0xff] %v609
      %642 = vst [vmem:[%s199 + $0x48] sm:$0xff] %v610
      %643 = vst [vmem:[%s199 + $0x50] sm:$0xff] %v611
      %644 = vst [vmem:[%s199 + $0x58] sm:$0xff] %v612
      %645 = vst [vmem:[%s199 + $0x60] sm:$0xff] %v613
      %646 = vst [vmem:[%s199 + $0x68] sm:$0xff] %v614
      %647 = vst [vmem:[%s199 + $0x70] sm:$0xff] %v615
      %648 = vst [vmem:[%s199 + $0x78] sm:$0xff] %v616
      %649 = vst [vmem:[%s199 + $0x80] sm:$0xff] %v617
      %650 = vst [vmem:[%s199 + $0x88] sm:$0xff] %v618
      %651 = vst [vmem:[%s199 + $0x90] sm:$0xff] %v619
      %652 = vst [vmem:[%s199 + $0x98] sm:$0xff] %v620
      %653 = vst [vmem:[%s199 + $0xa0] sm:$0xff] %v621
      %654 = vst [vmem:[%s199 + $0xa8] sm:$0xff] %v622
      %655 = vst [vmem:[%s199 + $0xb0] sm:$0xff] %v623
      %656 = vst [vmem:[%s199 + $0xb8] sm:$0xff] %v624
      %657 = vst [vmem:[%s199 + $0xc0] sm:$0xff] %v625
      %658 = vst [vmem:[%s199 + $0xc8] sm:$0xff] %v626
      %659 = vst [vmem:[%s199 + $0xd0] sm:$0xff] %v627
      %660 = vst [vmem:[%s199 + $0xd8] sm:$0xff] %v628
      %661 = vst [vmem:[%s199 + $0xe0] sm:$0xff] %v629
      %662 = vst [vmem:[%s199 + $0xe8] sm:$0xff] %v630
      %663 = vst [vmem:[%s199 + $0xf0] sm:$0xff] %v631
      %664 = vst [vmem:[%s199 + $0xf8] sm:$0xff] %v632
      %s665 = smul.u32 32, %s15
      %p666 = scmp.lt.s32.totalorder %s665, 63
      %s667 = scalar_select %p666, %s665, 63
      %s668 = smul.addr %s667, 8
      %s669 = scalar_lea.vmem %s4, %s668
      // Predicated region
      $region37: #{cb2d_forward.3} parent=35 // pred_check
        %p670 = pneg %p122
      $region38: #{cb2d_forward.3} parent=35 // pred_check_branch
        %672 = sbr.rel (%p670) target = $region40
      $region39: #{cb2d_forward.3} parent=35 // pred_region
        %s673 = smul.u32 32, %s15
      $region40: #{cb2d_forward.3} parent=35 // pred_fallthru
        _
    $region36: #{cb2d_forward.3} parent=5 // pred_fallthru
      _
    %p674 = scmp.le.s32.totalorder 2, %s10
    // Predicated region
    $region41: #{cb2d_forward.3} parent=5 // pred_check
      %p675 = pneg %p674
    $region42: #{cb2d_forward.3} parent=5 // pred_check_branch
      %677 = sbr.rel (%p675) target = $region44
    $region43: #{cb2d_forward.3} parent=5 // pred_region
      %s678 = ssub.s32 %s10, 2
      // Predicated region
      $region45: #{cb2d_forward.3} parent=43 // pred_check
        %p679 = pneg %p128
      $region46: #{cb2d_forward.3} parent=43 // pred_check_branch
        %681 = sbr.rel (%p679) target = $region48
      $region47: #{cb2d_forward.3} parent=43 // pred_region
        %s682 = smul.u32 32, %s16
        %p683 = scmp.lt.s32.totalorder %s682, 63
        %s684 = scalar_select %p683, %s682, 63
        %s685 = smul.addr %s684, 8
        %s686 = scalar_lea.vmem %s4, %s685
      $region48: #{cb2d_forward.3} parent=43 // pred_fallthru
        _
    $region44: #{cb2d_forward.3} parent=5 // pred_fallthru
      _
  $region6: #{cb2d_forward.3} parent=0 // loop_footer
    %s14 = sadd.s32 1, %s10
  $region7: #{cb2d_forward.3} parent=0 // loop_footer_branch
    %9 = sbr.rel target = $region3
  $region8: #{cb2d_forward.3} parent=0 // loop_exit
    _

</llo_original>
